<compile_context>
chip_gen: v5e
topology: v5e:2x2
jax: 0.10.0
libtpu: 0.0.40
codegen_flags: <defaults>
</compile_context>

<pallas_src>
import jax
import jax.numpy as jnp
from jax.experimental import pallas as pl
from jax.experimental.pallas import tpu as pltpu

# ---------------------------------------------------------------------------
# Module-level configuration (mirrors the globals referenced by the PyTorch code)
# ---------------------------------------------------------------------------
numberOfGeometricDimensions2DOD = 2
useGeometricHashingAMANN = True
useGeometricHashingProbabilisticKeypoints = False
useGeometricHashingReduceInputMagnitude = True
useGeometricHashingNormaliseOutput = True

GEOM_DIMS = numberOfGeometricDimensions2DOD                   # 2
NUM_KEYPOINTS = GEOM_DIMS + 1                                 # 3
NUM_PIXELS = 1
NUM_INPUTS = NUM_KEYPOINTS + NUM_PIXELS                       # 4 (non-probabilistic path)
INPUT_DIM = NUM_INPUTS * GEOM_DIMS                            # 8
PACKED_DIM = 2 * INPUT_DIM                                    # 16 (additive + multiplicative)
LHS_DIM = PACKED_DIM + 1                                      # 17 (+ ones row for the bias)
NUM_HIDDEN_LAYERS = NUM_KEYPOINTS                             # 3 AMANN layers (in=out=INPUT_DIM)
EPS = 1e-6
EXP_CLAMP = 80.0                                              # guard f32 overflow of exp()
MAX_TOKEN_TILE = 2048                                         # lanes per grid step (VMEM-safe on v7x)


# ---------------------------------------------------------------------------
# Pallas kernel: fused AMANN MLP stack over one lane-folded token tile.
# Features on sublanes, (batch*tokens) on lanes.
# ---------------------------------------------------------------------------
def amann_kernel(x_ref, p_ref, o_ref):
    # x_ref : (INPUT_DIM, T)                       lane-folded [keypoints(6); pixel pos(2)]
    # p_ref : (NUM_HIDDEN_LAYERS + 1, 16, 17)      packed block-diagonal params (+bias col)
    # o_ref : (GEOM_DIMS, T)
    T = x_ref.shape[1]

    x = x_ref[...].astype(jnp.float32)                          # (8, T)
    if useGeometricHashingReduceInputMagnitude:
        x = x / 5.0

    # Hoisted once; reused by every layer so the bias rides on the MXU contraction.
    ones = jnp.ones((1, T), jnp.float32)

    # TODO(synk): ATORpt_E2EAMANN.LayerAdditiveMultiplicativeClass source is not
    # provided; additive units = Linear, multiplicative units = exp(Linear(log|x|))
    # (product-of-powers), combined additively and passed through ReLU.
    for i in range(NUM_HIDDEN_LAYERS):
        p_i = p_ref[i].astype(jnp.bfloat16)                     # (16, 17) = [blkdiag(wa,wm).T | b]
        lhs = jnp.concatenate([x, jnp.log(jnp.abs(x) + EPS), ones], axis=0)   # (17, T), f32
        # Single fused matmul per layer; bf16 operands, f32 accumulation (bias included).
        z = jnp.dot(p_i, lhs.astype(jnp.bfloat16),
                    preferred_element_type=jnp.float32)          # (16, T)
        add = z[:INPUT_DIM]                                      # additive half (sublane-aligned)
        # Clamp pre-exp argument so the multiplicative path cannot overflow f32.
        mul = jnp.exp(jnp.minimum(z[INPUT_DIM:], EXP_CLAMP))
        x = jnp.maximum(add + mul, 0.0)                          # (8, T), f32

    # Final purely-additive layer INPUT_DIM -> GEOM_DIMS, same packed contraction
    # (rows 8..15 of the slab are zero, so reusing x for those lhs rows is a no-op).
    p_o = p_ref[NUM_HIDDEN_LAYERS].astype(jnp.bfloat16)          # (16, 17)
    lhs_f = jnp.concatenate([x, x, ones], axis=0).astype(jnp.bfloat16)        # (17, T)
    zf = jnp.dot(p_o, lhs_f, preferred_element_type=jnp.float32)              # (16, T)

    o_ref[...] = zf[:GEOM_DIMS].astype(o_ref.dtype)              # lane-dense (2, T) store


# ---------------------------------------------------------------------------
# Plain-JAX glue
# ---------------------------------------------------------------------------
def normalise_inputs_0to1(a, axis):
    # TODO(synk): ATORpt_E2Eoperations.normaliseInputs0to1 source is not provided;
    # using min/max normalisation along `axis`.
    a_min = jnp.min(a, axis=axis, keepdims=True)
    a_max = jnp.max(a, axis=axis, keepdims=True)
    return (a - a_min) / (a_max - a_min + EPS)


def init_params(key):
    """Deterministic synthetic parameter init for the AMANN layer stack."""
    ks = jax.random.split(key, 6)
    scale = 0.1
    wa = scale * jax.random.normal(ks[0], (NUM_HIDDEN_LAYERS, INPUT_DIM, INPUT_DIM), jnp.float32)
    ba = scale * jax.random.normal(ks[1], (NUM_HIDDEN_LAYERS, 1, INPUT_DIM), jnp.float32)
    wm = scale * jax.random.normal(ks[2], (NUM_HIDDEN_LAYERS, INPUT_DIM, INPUT_DIM), jnp.float32)
    bm = scale * jax.random.normal(ks[3], (NUM_HIDDEN_LAYERS, 1, INPUT_DIM), jnp.float32)
    wo = scale * jax.random.normal(ks[4], (INPUT_DIM, GEOM_DIMS), jnp.float32)
    bo = scale * jax.random.normal(ks[5], (1, GEOM_DIMS), jnp.float32)
    return dict(wa=wa, ba=ba, wm=wm, bm=bm, wo=wo, bo=bo)


def pack_params(params):
    """Pack all layer weights/biases into one slab:
       slab[i, :8, :8]   = wa[i].T       slab[i, :8, 16]  = ba[i]
       slab[i, 8:, 8:16] = wm[i].T       slab[i, 8:, 16]  = bm[i]
       slab[L, :2, :8]   = wo.T          slab[L, :2, 16]  = bo
       so  z = slab[i] @ [x; log|x|; 1]  computes both halves plus the bias on the MXU.
    """
    wa, ba, wm, bm, wo, bo = (params["wa"], params["ba"], params["wm"],
                              params["bm"], params["wo"], params["bo"])
    D, D2 = INPUT_DIM, PACKED_DIM
    slab = jnp.zeros((NUM_HIDDEN_LAYERS + 1, D2, LHS_DIM), jnp.float32)
    for i in range(NUM_HIDDEN_LAYERS):
        slab = slab.at[i, :D, :D].set(wa[i].T)
        slab = slab.at[i, D:, D:D2].set(wm[i].T)
        slab = slab.at[i, :D, D2].set(ba[i][0])
        slab = slab.at[i, D:, D2].set(bm[i][0])
    slab = slab.at[NUM_HIDDEN_LAYERS, :GEOM_DIMS, :D].set(wo.T)
    slab = slab.at[NUM_HIDDEN_LAYERS, :GEOM_DIMS, D2].set(bo[0])
    return slab


def _choose_token_tile(n_pad, max_tile=MAX_TOKEN_TILE):
    """Largest multiple of 128 that divides n_pad and is <= max_tile (static, trace-time)."""
    n_blocks = n_pad // 128
    max_blocks = max(1, min(n_blocks, max_tile // 128))
    best = 1
    for d in range(1, max_blocks + 1):
        if n_blocks % d == 0:
            best = d
    return best * 128


@jax.jit
def geometric_hashing_forward(images, posEmbeddings, sequences, featureMap, params):
    """Forward pass of GeometricHashingClass (AMANN path, non-probabilistic keypoints).

    images:        (B, C, H, W)  -- debug only in the reference, unused
    posEmbeddings: (S, 2)        -- per-token (x, y) positions
    sequences:     (B, S)        -- pixel values (unused in the AMANN path)
    featureMap:    (B, S)        -- per-token feature strengths
    returns:       (B, S, 2)     -- geo-normalised positional embeddings
    """
    del images, sequences  # unused in the AMANN path
    B, S = featureMap.shape

    # normaliseInputs0to1(posEmbeddings, dim=0)
    pos_n = normalise_inputs_0to1(posEmbeddings.astype(jnp.float32), axis=0)   # (S, 2)

    # TODO(synk): ATORpt_E2Ekeypoints.performKeypointDetection source is not
    # provided; using top-k feature-map tokens per batch as the 3 keypoints.
    _, kp_idx = jax.lax.top_k(featureMap, NUM_KEYPOINTS)                        # (B, 3)
    keypoints = pos_n[kp_idx].reshape(B, NUM_KEYPOINTS * GEOM_DIMS)             # (B, 6)

    # Lane-folded input (8, B*S): rows 0..5 = per-batch keypoints (pre-added here, no
    # per-batch DMA in the kernel), rows 6..7 = normalised pixel positions.
    x_bse = jnp.concatenate(
        [jnp.broadcast_to(keypoints[:, None, :], (B, S, NUM_KEYPOINTS * GEOM_DIMS)),
         jnp.broadcast_to(pos_n[None, :, :], (B, S, GEOM_DIMS))],
        axis=-1)                                                                # (B, S, 8)
    N = B * S
    n_pad = ((N + 127) // 128) * 128                                            # lane-dense pad
    x_in = x_bse.reshape(N, INPUT_DIM).T                                        # (8, N)
    x_in = jnp.pad(x_in, ((0, 0), (0, n_pad - N))).astype(jnp.float32)          # (8, n_pad)

    slab = pack_params(params)                                                  # (4, 16, 17)

    tile = _choose_token_tile(n_pad)
    grid = (n_pad // tile,)

    flops = n_pad * (NUM_HIDDEN_LAYERS + 1) * 2 * PACKED_DIM * LHS_DIM
    transcendentals = n_pad * NUM_HIDDEN_LAYERS * PACKED_DIM                    # 8 log + 8 exp / layer
    bytes_accessed = 4 * (x_in.size + slab.size + GEOM_DIMS * n_pad)

    out = pl.pallas_call(
        amann_kernel,
        out_shape=jax.ShapeDtypeStruct((GEOM_DIMS, n_pad), jnp.float32),
        grid_spec=pltpu.PrefetchScalarGridSpec(
            num_scalar_prefetch=0,
            grid=grid,
            in_specs=[
                pl.BlockSpec((INPUT_DIM, tile), lambda t: (0, t)),   # token tile (lane-dense)
                pl.BlockSpec(slab.shape, lambda t: (0, 0, 0)),       # packed params (resident)
            ],
            out_specs=pl.BlockSpec((GEOM_DIMS, tile), lambda t: (0, t)),
        ),
        compiler_params=pltpu.CompilerParams(
            dimension_semantics=("parallel",)),                      # token tiles are independent
        cost_estimate=pl.CostEstimate(
            flops=int(flops),
            transcendentals=int(transcendentals),
            bytes_accessed=int(bytes_accessed)),
    )(x_in, slab)                                                                # (2, n_pad)

    # Unfold the batch and restore the caller-facing (B, S, 2) layout (tiny data).
    y = out[:, :N].reshape(GEOM_DIMS, B, S)
    y = jnp.transpose(y, (1, 2, 0))                                              # (B, S, 2)

    if useGeometricHashingNormaliseOutput:
        # normaliseInputs0to1(..., dim=0) per batch: min/max over the sequence axis.
        # Kept in the wrapper (global-over-S reduction) so the kernel stays token-tileable.
        y = normalise_inputs_0to1(y, axis=1)
    return y


# ---------------------------------------------------------------------------
# main
# ---------------------------------------------------------------------------
if __name__ == "__main__":
    numberOfPatches = 4
    numberOfTokenDimensions = 3
    B = 2
    S = numberOfPatches * numberOfPatches           # 16 tokens

    key = jax.random.PRNGKey(0)
    k_img, k_seq, k_feat, k_par = jax.random.split(key, 4)

    # images (NCHW, debug-only in the reference)
    images = jax.random.uniform(k_img, (B, numberOfTokenDimensions, 8, 8), jnp.float32)
    # per-token (x, y) positional embeddings on the patch grid
    yy, xx = jnp.meshgrid(jnp.arange(numberOfPatches, dtype=jnp.float32),
                          jnp.arange(numberOfPatches, dtype=jnp.float32),
                          indexing="ij")
    posEmbeddings = jnp.stack([xx.reshape(-1), yy.reshape(-1)], axis=-1)        # (16, 2)
    # pixel-value sequences and feature map
    sequences = jax.random.uniform(k_seq, (B, S), jnp.float32)
    featureMap = jax.random.uniform(k_feat, (B, S), jnp.float32)

    params = init_params(k_par)

    out = geometric_hashing_forward(images, posEmbeddings, sequences, featureMap, params)
    out = jax.block_until_ready(out)

    assert out.shape == (B, S, numberOfGeometricDimensions2DOD)
    assert bool(jnp.all(jnp.isfinite(out)))
    print("KERNEL_OK")
</pallas_src>

<mosaic_0001>
module attributes {stable_mosaic.version = 11 : i64} {
  func.func @amann_kernel(%arg0: i32, %arg1: memref<8x128xf32, #tpu.memory_space<vmem>>, %arg2: memref<4x16x17xf32, #tpu.memory_space<vmem>>, %arg3: memref<2x128xf32, #tpu.memory_space<vmem>>) attributes {dimension_semantics = [#tpu.dimension_semantics<parallel>], iteration_bounds = array<i64: 1>, scalar_prefetch = 0 : i64, scratch_operands = 0 : i64, tpu.core_type = #tpu.core_type<tc>, window_params = [{transform_indices = @transform_0, window_bounds = array<i64: 8, 128>}, {pipeline_mode = #tpu.pipeline_mode<synchronous>, transform_indices = @transform_1, window_bounds = array<i64: 4, 16, 17>}, {transform_indices = @transform_2, window_bounds = array<i64: 2, 128>}]} {
    %c0 = arith.constant 0 : index
    %c0_0 = arith.constant 0 : index
    %0 = vector.load %arg1[%c0, %c0_0] : memref<8x128xf32, #tpu.memory_space<vmem>>, vector<8x128xf32>
    %cst = arith.constant 5.000000e+00 : f32
    %1 = vector.broadcast %cst : f32 to vector<8x128xf32>
    %2 = arith.divf %0, %1 : vector<8x128xf32>
    %cst_1 = arith.constant 1.000000e+00 : f32
    %3 = vector.broadcast %cst_1 : f32 to vector<1x128xf32>
    %c0_2 = arith.constant 0 : index
    %c0_3 = arith.constant 0 : index
    %c0_4 = arith.constant 0 : index
    %4 = vector.load %arg2[%c0_2, %c0_3, %c0_4] : memref<4x16x17xf32, #tpu.memory_space<vmem>>, vector<1x16x17xf32>
    %5 = vector.shape_cast %4 : vector<1x16x17xf32> to vector<16x17xf32>
    %6 = arith.truncf %5 : vector<16x17xf32> to vector<16x17xbf16>
    %7 = math.absf %2 : vector<8x128xf32>
    %cst_5 = arith.constant 9.99999997E-7 : f32
    %8 = vector.broadcast %cst_5 : f32 to vector<8x128xf32>
    %9 = arith.addf %7, %8 : vector<8x128xf32>
    %10 = math.log %9 : vector<8x128xf32>
    %11 = tpu.concatenate %2, %10, %3 in 0 : vector<8x128xf32>, vector<8x128xf32>, vector<1x128xf32> -> vector<17x128xf32>
    %12 = arith.truncf %11 : vector<17x128xf32> to vector<17x128xbf16>
    %cst_6 = arith.constant dense<0.000000e+00> : vector<16x128xf32>
    %13 = tpu.matmul %6, %12, %cst_6 {dimension_numbers = #tpu.dot_dimension_numbers<[1], [0], [0], [1], [0, 0, 1, 1], [], []>} : vector<16x17xbf16>, vector<17x128xbf16>, vector<16x128xf32> -> vector<16x128xf32>
    %14 = vector.extract_strided_slice %13 {offsets = [0, 0], sizes = [8, 128], strides = [1, 1]} : vector<16x128xf32> to vector<8x128xf32>
    %15 = vector.extract_strided_slice %13 {offsets = [8, 0], sizes = [8, 128], strides = [1, 1]} : vector<16x128xf32> to vector<8x128xf32>
    %cst_7 = arith.constant 8.000000e+01 : f32
    %16 = vector.broadcast %cst_7 : f32 to vector<8x128xf32>
    %17 = arith.minimumf %15, %16 : vector<8x128xf32>
    %18 = math.exp %17 : vector<8x128xf32>
    %19 = arith.addf %14, %18 : vector<8x128xf32>
    %cst_8 = arith.constant 0.000000e+00 : f32
    %20 = vector.broadcast %cst_8 : f32 to vector<8x128xf32>
    %21 = arith.maximumf %19, %20 : vector<8x128xf32>
    %c1 = arith.constant 1 : index
    %c0_9 = arith.constant 0 : index
    %c0_10 = arith.constant 0 : index
    %22 = vector.load %arg2[%c1, %c0_9, %c0_10] : memref<4x16x17xf32, #tpu.memory_space<vmem>>, vector<1x16x17xf32>
    %23 = vector.shape_cast %22 : vector<1x16x17xf32> to vector<16x17xf32>
    %24 = arith.truncf %23 : vector<16x17xf32> to vector<16x17xbf16>
    %25 = math.absf %21 : vector<8x128xf32>
    %cst_11 = arith.constant 9.99999997E-7 : f32
    %26 = vector.broadcast %cst_11 : f32 to vector<8x128xf32>
    %27 = arith.addf %25, %26 : vector<8x128xf32>
    %28 = math.log %27 : vector<8x128xf32>
    %29 = tpu.concatenate %21, %28, %3 in 0 : vector<8x128xf32>, vector<8x128xf32>, vector<1x128xf32> -> vector<17x128xf32>
    %30 = arith.truncf %29 : vector<17x128xf32> to vector<17x128xbf16>
    %cst_12 = arith.constant dense<0.000000e+00> : vector<16x128xf32>
    %31 = tpu.matmul %24, %30, %cst_12 {dimension_numbers = #tpu.dot_dimension_numbers<[1], [0], [0], [1], [0, 0, 1, 1], [], []>} : vector<16x17xbf16>, vector<17x128xbf16>, vector<16x128xf32> -> vector<16x128xf32>
    %32 = vector.extract_strided_slice %31 {offsets = [0, 0], sizes = [8, 128], strides = [1, 1]} : vector<16x128xf32> to vector<8x128xf32>
    %33 = vector.extract_strided_slice %31 {offsets = [8, 0], sizes = [8, 128], strides = [1, 1]} : vector<16x128xf32> to vector<8x128xf32>
    %cst_13 = arith.constant 8.000000e+01 : f32
    %34 = vector.broadcast %cst_13 : f32 to vector<8x128xf32>
    %35 = arith.minimumf %33, %34 : vector<8x128xf32>
    %36 = math.exp %35 : vector<8x128xf32>
    %37 = arith.addf %32, %36 : vector<8x128xf32>
    %cst_14 = arith.constant 0.000000e+00 : f32
    %38 = vector.broadcast %cst_14 : f32 to vector<8x128xf32>
    %39 = arith.maximumf %37, %38 : vector<8x128xf32>
    %c2 = arith.constant 2 : index
    %c0_15 = arith.constant 0 : index
    %c0_16 = arith.constant 0 : index
    %40 = vector.load %arg2[%c2, %c0_15, %c0_16] : memref<4x16x17xf32, #tpu.memory_space<vmem>>, vector<1x16x17xf32>
    %41 = vector.shape_cast %40 : vector<1x16x17xf32> to vector<16x17xf32>
    %42 = arith.truncf %41 : vector<16x17xf32> to vector<16x17xbf16>
    %43 = math.absf %39 : vector<8x128xf32>
    %cst_17 = arith.constant 9.99999997E-7 : f32
    %44 = vector.broadcast %cst_17 : f32 to vector<8x128xf32>
    %45 = arith.addf %43, %44 : vector<8x128xf32>
    %46 = math.log %45 : vector<8x128xf32>
    %47 = tpu.concatenate %39, %46, %3 in 0 : vector<8x128xf32>, vector<8x128xf32>, vector<1x128xf32> -> vector<17x128xf32>
    %48 = arith.truncf %47 : vector<17x128xf32> to vector<17x128xbf16>
    %cst_18 = arith.constant dense<0.000000e+00> : vector<16x128xf32>
    %49 = tpu.matmul %42, %48, %cst_18 {dimension_numbers = #tpu.dot_dimension_numbers<[1], [0], [0], [1], [0, 0, 1, 1], [], []>} : vector<16x17xbf16>, vector<17x128xbf16>, vector<16x128xf32> -> vector<16x128xf32>
    %50 = vector.extract_strided_slice %49 {offsets = [0, 0], sizes = [8, 128], strides = [1, 1]} : vector<16x128xf32> to vector<8x128xf32>
    %51 = vector.extract_strided_slice %49 {offsets = [8, 0], sizes = [8, 128], strides = [1, 1]} : vector<16x128xf32> to vector<8x128xf32>
    %cst_19 = arith.constant 8.000000e+01 : f32
    %52 = vector.broadcast %cst_19 : f32 to vector<8x128xf32>
    %53 = arith.minimumf %51, %52 : vector<8x128xf32>
    %54 = math.exp %53 : vector<8x128xf32>
    %55 = arith.addf %50, %54 : vector<8x128xf32>
    %cst_20 = arith.constant 0.000000e+00 : f32
    %56 = vector.broadcast %cst_20 : f32 to vector<8x128xf32>
    %57 = arith.maximumf %55, %56 : vector<8x128xf32>
    %c3 = arith.constant 3 : index
    %c0_21 = arith.constant 0 : index
    %c0_22 = arith.constant 0 : index
    %58 = vector.load %arg2[%c3, %c0_21, %c0_22] : memref<4x16x17xf32, #tpu.memory_space<vmem>>, vector<1x16x17xf32>
    %59 = vector.shape_cast %58 : vector<1x16x17xf32> to vector<16x17xf32>
    %60 = arith.truncf %59 : vector<16x17xf32> to vector<16x17xbf16>
    %61 = tpu.concatenate %57, %57, %3 in 0 : vector<8x128xf32>, vector<8x128xf32>, vector<1x128xf32> -> vector<17x128xf32>
    %62 = arith.truncf %61 : vector<17x128xf32> to vector<17x128xbf16>
    %cst_23 = arith.constant dense<0.000000e+00> : vector<16x128xf32>
    %63 = tpu.matmul %60, %62, %cst_23 {dimension_numbers = #tpu.dot_dimension_numbers<[1], [0], [0], [1], [0, 0, 1, 1], [], []>} : vector<16x17xbf16>, vector<17x128xbf16>, vector<16x128xf32> -> vector<16x128xf32>
    %64 = vector.extract_strided_slice %63 {offsets = [0, 0], sizes = [2, 128], strides = [1, 1]} : vector<16x128xf32> to vector<2x128xf32>
    %c0_24 = arith.constant 0 : index
    %c0_25 = arith.constant 0 : index
    %65 = vector.load %arg3[%c0_24, %c0_25] : memref<2x128xf32, #tpu.memory_space<vmem>>, vector<2x128xf32>
    tpu.vector_store %arg3[%c0_24, %c0_25], %64 {strides = array<i32>} : memref<2x128xf32, #tpu.memory_space<vmem>>, vector<2x128xf32>,
    return
  }
  func.func @transform_0(%arg0: i32) -> (i32, i32) {
    %c0_i32 = arith.constant 0 : i32
    %c0_i32_0 = arith.constant 0 : i32
    return %c0_i32, %arg0 : i32, i32
  }
  func.func @transform_1(%arg0: i32) -> (i32, i32, i32) {
    %c0_i32 = arith.constant 0 : i32
    %c0_i32_0 = arith.constant 0 : i32
    %c0_i32_1 = arith.constant 0 : i32
    %c0_i32_2 = arith.constant 0 : i32
    return %c0_i32, %c0_i32_0, %c0_i32_1 : i32, i32, i32
  }
  func.func @transform_2(%arg0: i32) -> (i32, i32) {
    %c0_i32 = arith.constant 0 : i32
    %c0_i32_0 = arith.constant 0 : i32
    return %c0_i32, %arg0 : i32, i32
  }
}

</mosaic_0001>

<llo_original>
// kernel: geometric_hashing_forward.1
$region0: #{geometric_hashing_forward.1}
  #allocation0 [shape = 'u32[]', space=smem, size = 0x4, offset = 0x4, fixed_abs, tag = 'smem constant byte address 0x4 - core index']
  #allocation1 [shape = 'u32[72,128]{1,0:T(1,128)}', space=vmem, size = 0x9000, scoped, tag = 'internal scratch']
  %s0 = inlined_call_operand.vmem [shape: f32[8,128], index: 0, kind: input, shape index: {}]
  %s1 = inlined_call_operand.vmem [shape: f32[4,16,17], index: 1, kind: input, shape index: {}]
  %s2 = inlined_call_operand.vmem [shape: f32[2,128], index: 2, kind: output, shape index: {}]
  %s3 = sld [smem:[#allocation0]]
  $region18: #{geometric_hashing_forward.1} parent=0
    _
  %s5 = ssub.s32 1, %s3
  %s6 = scalar_select 0, %s5, %s3
  // Predicated region
  $region2: #{geometric_hashing_forward.1} parent=0 // pred_check
    _
  $region3: #{geometric_hashing_forward.1} parent=0 // pred_check_branch
    %8 = sbr.rel (0) target = $region5
  $region4: #{geometric_hashing_forward.1} parent=0 // pred_region
    _
  $region5: #{geometric_hashing_forward.1} parent=0 // pred_fallthru
    _
  // Predicated region
  $region6: #{geometric_hashing_forward.1} parent=0 // pred_check
    _
  $region7: #{geometric_hashing_forward.1} parent=0 // pred_check_branch
    %10 = sbr.rel (0) target = $region9
  $region8: #{geometric_hashing_forward.1} parent=0 // pred_region
    _
  $region9: #{geometric_hashing_forward.1} parent=0 // pred_fallthru
    _
  %v12 = vld [vmem:[%s0] sm:$0xff]
  %v13 = vrcp.pop 5.0
  %v14 = vmul.f32 5.0, %v13
  %v15 = vsub.f32 1.0, %v14
  %v16 = vmul.f32 %v13, %v15
  %v17 = vadd.f32 %v13, %v16
  %vm18 = vweird.f32 %v13
  %v19 = vsel %vm18, %v13, %v17
  %v20 = vmul.f32 %v12, %v19
  %v21 = vld [vmem:[%s1] sm:$0xff]
  %v22 = vld [vmem:[%s1 + $0x8] sm:$0xff]
  %v23 = vpack.c.bf16 %v22, %v21
  %v24 = vand.u32 2147483647, %v20
  %v25 = vadd.f32 %v24, 1e-06
  %v26 = vlog2.pop %v25
  %v27 = vmul.f32 %v26, 0.6931472
  %v28 = vpack.c.bf16 %v27, %v20
  %v29 = vpack.c.bf16 1.0, 1.0
  %vm30 = vcmask 138240
  %v32 = vsel %vm30, %v23, 0
  %vm34 = vcmask 1040384
  %v35 = vsel 0, 4294967295, 65535
  %v36 = vsel %vm34, %v35, 0
  %v38 = vand.u32 %v29, %v36
  %40 = vmatpush.bf16.msra.mxu0 0
  %41 = vmatpush.bf16.msra.mxu0 0
  %42 = vmatpush.bf16.msra.mxu0 0
  %43 = vmatpush.bf16.msra.mxu0 0
  %44 = vmatpush.bf16.msra.mxu0 0
  %45 = vmatpush.bf16.msra.mxu0 0
  %46 = vmatpush.bf16.msra.mxu0 %v38
  %47 = vmatpush.bf16.msra.mxu0 %v28
  %48 = vmatmul.bf16.gmra.mxu0 %v32
  %v49 = vpop.f32.mrf.mxu0
  %v50 = vadd.f32 0.0, %v49
  %v51 = vpop.f32.mrf.mxu0
  %v52 = vadd.f32 0.0, %v51
  %53 = vdwg.mxu0
  %v54 = vmin.f32 %v52, 80.0
  %v55 = vmul.f32 %v54, 1.442695
  %v56 = vpow.pop %v55
  %v57 = vadd.f32 %v50, %v56
  %v58 = vmax.f32 %v57, 0.0
  %s59 = scalar_lea.vmem %s1, 16
  %v60 = vld [vmem:[%s59] sm:$0xff]
  %v61 = vld [vmem:[%s59 + $0x8] sm:$0xff]
  %v62 = vpack.c.bf16 %v61, %v60
  %v63 = vand.u32 2147483647, %v58
  %v64 = vadd.f32 %v63, 1e-06
  %v65 = vlog2.pop %v64
  %v66 = vmul.f32 %v65, 0.6931472
  %v67 = vpack.c.bf16 %v66, %v58
  %v69 = vsel %vm30, %v62, 0
  %71 = vmatpush.bf16.msra.mxu0 0
  %72 = vmatpush.bf16.msra.mxu0 0
  %73 = vmatpush.bf16.msra.mxu0 0
  %74 = vmatpush.bf16.msra.mxu0 0
  %75 = vmatpush.bf16.msra.mxu0 0
  %76 = vmatpush.bf16.msra.mxu0 0
  %77 = vmatpush.bf16.msra.mxu0 %v38
  %78 = vmatpush.bf16.msra.mxu0 %v67
  %79 = vmatmul.bf16.gmra.mxu0 %v69
  %v80 = vpop.f32.mrf.mxu0
  %v81 = vadd.f32 0.0, %v80
  %v82 = vpop.f32.mrf.mxu0
  %v83 = vadd.f32 0.0, %v82
  %84 = vdwg.mxu0
  %v85 = vmin.f32 %v83, 80.0
  %v86 = vmul.f32 %v85, 1.442695
  %v87 = vpow.pop %v86
  %v88 = vadd.f32 %v81, %v87
  %v89 = vmax.f32 %v88, 0.0
  %s90 = scalar_lea.vmem %s1, 32
  %v91 = vld [vmem:[%s90] sm:$0xff]
  %v92 = vld [vmem:[%s90 + $0x8] sm:$0xff]
  %v93 = vpack.c.bf16 %v92, %v91
  %v94 = vand.u32 2147483647, %v89
  %v95 = vadd.f32 %v94, 1e-06
  %v96 = vlog2.pop %v95
  %v97 = vmul.f32 %v96, 0.6931472
  %v98 = vpack.c.bf16 %v97, %v89
  %v100 = vsel %vm30, %v93, 0
  %102 = vmatpush.bf16.msra.mxu0 0
  %103 = vmatpush.bf16.msra.mxu0 0
  %104 = vmatpush.bf16.msra.mxu0 0
  %105 = vmatpush.bf16.msra.mxu0 0
  %106 = vmatpush.bf16.msra.mxu0 0
  %107 = vmatpush.bf16.msra.mxu0 0
  %108 = vmatpush.bf16.msra.mxu0 %v38
  %109 = vmatpush.bf16.msra.mxu0 %v98
  %110 = vmatmul.bf16.gmra.mxu0 %v100
  %v111 = vpop.f32.mrf.mxu0
  %v112 = vadd.f32 0.0, %v111
  %v113 = vpop.f32.mrf.mxu0
  %v114 = vadd.f32 0.0, %v113
  %115 = vdwg.mxu0
  %v116 = vmin.f32 %v114, 80.0
  %v117 = vmul.f32 %v116, 1.442695
  %v118 = vpow.pop %v117
  %v119 = vadd.f32 %v112, %v118
  %v120 = vmax.f32 %v119, 0.0
  %s121 = scalar_lea.vmem %s1, 48
  %v122 = vld [vmem:[%s121] sm:$0xff]
  %v123 = vld [vmem:[%s121 + $0x8] sm:$0xff]
  %v124 = vpack.c.bf16 %v123, %v122
  %v125 = vpack.c.bf16 %v120, %v120
  %v127 = vsel %vm30, %v124, 0
  %129 = vmatpush.bf16.msra.mxu0 0
  %130 = vmatpush.bf16.msra.mxu0 0
  %131 = vmatpush.bf16.msra.mxu0 0
  %132 = vmatpush.bf16.msra.mxu0 0
  %133 = vmatpush.bf16.msra.mxu0 0
  %134 = vmatpush.bf16.msra.mxu0 0
  %135 = vmatpush.bf16.msra.mxu0 %v38
  %136 = vmatpush.bf16.msra.mxu0 %v125
  %137 = vmatmul.bf16.gmra.mxu0 %v127
  %v138 = vpop.f32.mrf.mxu0
  %v139 = vadd.f32 0.0, %v138
  %v140 = vpop.f32.mrf.mxu0
  %141 = vdwg.mxu0
  %142 = vst [vmem:[%s2] sm:$0x3] %v139
  // Predicated region
  $region10: #{geometric_hashing_forward.1} parent=0 // pred_check
    _
  $region11: #{geometric_hashing_forward.1} parent=0 // pred_check_branch
    %144 = sbr.rel (0) target = $region13
  $region12: #{geometric_hashing_forward.1} parent=0 // pred_region
    _
  $region13: #{geometric_hashing_forward.1} parent=0 // pred_fallthru
    _
  // Predicated region
  $region14: #{geometric_hashing_forward.1} parent=0 // pred_check
    _
  $region15: #{geometric_hashing_forward.1} parent=0 // pred_check_branch
    %146 = sbr.rel (0) target = $region17
  $region16: #{geometric_hashing_forward.1} parent=0 // pred_region
    _
  $region17: #{geometric_hashing_forward.1} parent=0 // pred_fallthru
    _

</llo_original>
